<compile_context>
chip_gen: v5e
topology: v5e:2x2
jax: 0.10.0
libtpu: 0.0.40
codegen_flags: <defaults>
</compile_context>

<pallas_src>
import functools

import jax
import jax.numpy as jnp
from jax.experimental import pallas as pl
from jax.experimental.pallas import tpu as pltpu


def _round_up(x, m):
    return (x + m - 1) // m * m


def _row_tile(n):
    """Output-row tile. Small enough that the leading 'parallel' grid axis has
    extent >= 2 for typical n (megacore / v7x dual-TC), large enough to keep
    per-step overhead amortized."""
    if n <= 128:
        return 64
    if n <= 2048:
        return 128
    return 256


def _lane_tile(n_pad):
    """Adjacency lane/K tile: the pipeline is HBM-bound, so use the widest
    tile (<= 1024) that divides the padded node count."""
    if n_pad <= 1024:
        return n_pad
    for cand in (1024, 512, 256, 128):
        if n_pad % cand == 0:
            return cand
    return n_pad


# ---------------------------------------------------------------------------
# Scaled feature transform:  out = row_scale * (x @ w_t),  bf16 MXU operands,
# f32 accumulation, bf16 output (the D^-1/2 column scale of the following
# propagation is pre-applied here so propagate never touches it).
# ---------------------------------------------------------------------------
def _linear_kernel(x_ref, w_ref, s_ref, o_ref):
    out = jnp.dot(x_ref[...].astype(jnp.bfloat16), w_ref[...],
                  preferred_element_type=jnp.float32)
    o_ref[...] = (out * s_ref[...]).astype(o_ref.dtype)


def _linear_acc_kernel(x_ref, w_ref, s_ref, o_ref, acc_ref):
    k = pl.program_id(1)

    @pl.when(k == 0)
    def _():
        acc_ref[...] = jnp.zeros_like(acc_ref)

    acc_ref[...] += jnp.dot(x_ref[...].astype(jnp.bfloat16), w_ref[...],
                            preferred_element_type=jnp.float32)

    @pl.when(k == pl.num_programs(1) - 1)
    def _():
        o_ref[...] = (acc_ref[...] * s_ref[...]).astype(o_ref.dtype)


def scaled_linear(x, w_t, row_scale, *, tm, out_dtype=jnp.bfloat16):
    M, K = x.shape
    K2, N = w_t.shape
    assert K == K2 and M % tm == 0

    # split K only when it is big and lane-aligned; otherwise one full block
    tk = K
    for cand in (1024, 512):
        if K > cand and K % cand == 0:
            tk = cand
            break
    ksteps = K // tk

    if ksteps == 1:
        return pl.pallas_call(
            _linear_kernel,
            out_shape=jax.ShapeDtypeStruct((M, N), out_dtype),
            grid_spec=pltpu.PrefetchScalarGridSpec(
                num_scalar_prefetch=0,
                grid=(M // tm,),
                in_specs=[pl.BlockSpec((tm, K), lambda i: (i, 0)),
                          pl.BlockSpec((K, N), lambda i: (0, 0)),
                          pl.BlockSpec((tm, 1), lambda i: (i, 0))],
                out_specs=pl.BlockSpec((tm, N), lambda i: (i, 0)),
            ),
            compiler_params=pltpu.CompilerParams(
                dimension_semantics=("parallel",)),
        )(x, w_t, row_scale)

    return pl.pallas_call(
        _linear_acc_kernel,
        out_shape=jax.ShapeDtypeStruct((M, N), out_dtype),
        grid_spec=pltpu.PrefetchScalarGridSpec(
            num_scalar_prefetch=0,
            grid=(M // tm, ksteps),
            in_specs=[pl.BlockSpec((tm, tk), lambda i, k: (i, k)),
                      pl.BlockSpec((tk, N), lambda i, k: (k, 0)),
                      pl.BlockSpec((tm, 1), lambda i, k: (i, 0))],
            out_specs=pl.BlockSpec((tm, N), lambda i, k: (i, 0)),
            scratch_shapes=[pltpu.VMEM((tm, N), jnp.float32)],
        ),
        compiler_params=pltpu.CompilerParams(
            dimension_semantics=("parallel", "arbitrary")),
    )(x, w_t, row_scale)


# ---------------------------------------------------------------------------
# Fused GCN propagation:  out = D^-1/2 @ (A^T @ x_scaled)  (+bias) (+relu)
# x_scaled already carries the D^-1/2 column scale (applied in the linear
# epilogue).  Adjacency tiles arrive as int8 and are upcast to bf16 in-kernel;
# accumulation is f32; the row scale is applied once on the accumulator.
# ---------------------------------------------------------------------------
def _prop_kernel(adj_ref, dr_ref, x_ref, b_ref, o_ref, *, use_bias, relu):
    out = jnp.dot(adj_ref[...].astype(jnp.bfloat16), x_ref[...],
                  preferred_element_type=jnp.float32)
    out = out * dr_ref[...]
    if use_bias:
        out = out + b_ref[...]
    if relu:
        out = jnp.maximum(out, 0.0)
    o_ref[...] = out.astype(o_ref.dtype)


def _prop_acc_kernel(adj_ref, dr_ref, x_ref, b_ref, o_ref, acc_ref,
                     *, use_bias, relu):
    k = pl.program_id(1)

    @pl.when(k == 0)
    def _():
        acc_ref[...] = jnp.zeros_like(acc_ref)

    acc_ref[...] += jnp.dot(adj_ref[...].astype(jnp.bfloat16), x_ref[...],
                            preferred_element_type=jnp.float32)

    @pl.when(k == pl.num_programs(1) - 1)
    def _():
        out = acc_ref[...] * dr_ref[...]
        if use_bias:
            out = out + b_ref[...]
        if relu:
            out = jnp.maximum(out, 0.0)
        o_ref[...] = out.astype(o_ref.dtype)


def gcn_propagate(adj_t, d_inv_sqrt, x, bias=None, relu=False,
                  *, tm, tk, out_dtype):
    n_pad = adj_t.shape[0]
    F = x.shape[1]
    use_bias = bias is not None
    bias2d = (jnp.zeros((1, F), jnp.float32) if bias is None
              else bias.reshape(1, F).astype(jnp.float32))
    ksteps = n_pad // tk

    if ksteps == 1:
        kern = functools.partial(_prop_kernel, use_bias=use_bias, relu=relu)
        return pl.pallas_call(
            kern,
            out_shape=jax.ShapeDtypeStruct((n_pad, F), out_dtype),
            grid_spec=pltpu.PrefetchScalarGridSpec(
                num_scalar_prefetch=0,
                grid=(n_pad // tm,),
                in_specs=[pl.BlockSpec((tm, n_pad), lambda i: (i, 0)),   # A^T (int8)
                          pl.BlockSpec((tm, 1), lambda i: (i, 0)),       # d^-1/2 rows
                          pl.BlockSpec((n_pad, F), lambda i: (0, 0)),    # x (bf16, pre-scaled)
                          pl.BlockSpec((1, F), lambda i: (0, 0))],       # bias
                out_specs=pl.BlockSpec((tm, F), lambda i: (i, 0)),
            ),
            compiler_params=pltpu.CompilerParams(
                dimension_semantics=("parallel",)),
        )(adj_t, d_inv_sqrt, x, bias2d)

    kern = functools.partial(_prop_acc_kernel, use_bias=use_bias, relu=relu)
    return pl.pallas_call(
        kern,
        out_shape=jax.ShapeDtypeStruct((n_pad, F), out_dtype),
        grid_spec=pltpu.PrefetchScalarGridSpec(
            num_scalar_prefetch=0,
            grid=(n_pad // tm, ksteps),
            in_specs=[pl.BlockSpec((tm, tk), lambda i, k: (i, k)),       # A^T (int8)
                      pl.BlockSpec((tm, 1), lambda i, k: (i, 0)),        # d^-1/2 rows
                      pl.BlockSpec((tk, F), lambda i, k: (k, 0)),        # x (bf16, pre-scaled)
                      pl.BlockSpec((1, F), lambda i, k: (0, 0))],        # bias
            out_specs=pl.BlockSpec((tm, F), lambda i, k: (i, 0)),
            scratch_shapes=[pltpu.VMEM((tm, F), jnp.float32)],
        ),
        compiler_params=pltpu.CompilerParams(
            dimension_semantics=("parallel", "arbitrary")),
    )(adj_t, d_inv_sqrt, x, bias2d)


# -------------------------------- GCN forward --------------------------------
def gcn_forward(attr_idx, edge_idx, n, d, params):
    n_hidden = params["W1"].shape[0]

    tm = _row_tile(n)
    n_pad = _round_up(n, tm)
    tk = _lane_tile(n_pad)
    d_pad = _round_up(d, 128)

    src, tgt = edge_idx[0], edge_idx[1]

    # deg^-1/2 straight from the edge list (O(nnz), no n^2 degree pass):
    # gcn_norm with unit weights + add_remaining_self_loops ->
    # deg[t] = 1 + #(non-self-loop edges into t).  Padded nodes get 0.
    not_self = (src != tgt).astype(jnp.float32)
    deg = jnp.zeros((n,), jnp.float32).at[tgt].add(not_self) + 1.0
    dinv = jax.lax.rsqrt(deg)
    dinv = jnp.pad(dinv, (0, n_pad - n)).reshape(n_pad, 1)

    # dense transposed adjacency (rows = targets), built directly in its final
    # padded int8 form; exactly one unit self loop per real node
    # (add_remaining_self_loops semantics with unit edge weights).
    adj_t = jnp.zeros((n_pad, n_pad), jnp.int8)
    adj_t = adj_t.at[tgt, src].add(jnp.ones(tgt.shape, jnp.int8))
    idx = jnp.arange(n)
    adj_t = adj_t.at[idx, idx].set(jnp.ones((n,), jnp.int8))

    # dense node features, built directly padded + bf16 (values are exact
    # small integer counts).
    attr = jnp.zeros((n_pad, d_pad), jnp.bfloat16)
    attr = attr.at[attr_idx[0], attr_idx[1]].add(
        jnp.ones((attr_idx.shape[1],), jnp.bfloat16))

    w1_t = jnp.zeros((d_pad, n_hidden), jnp.bfloat16).at[:d].set(
        jnp.asarray(params["W1"].T, jnp.bfloat16))
    w2_t = jnp.asarray(params["W2"].T, jnp.bfloat16)

    # conv1 (SparseGCNConv, no bias): relu(A_norm @ (attr @ W1.T))
    # The D^-1/2 column scale + bf16 cast are fused into the linear epilogue.
    x1 = scaled_linear(attr, w1_t, dinv, tm=tm)
    h1 = gcn_propagate(adj_t, dinv, x1, relu=True, tm=tm, tk=tk,
                       out_dtype=jnp.bfloat16)

    # TODO(synk): F.dropout(p=0.5) is stochastic in training mode; eval-mode
    #             identity is implemented here.

    # conv2 (GCNConv with bias): A_norm @ (h1 @ W2.T) + b2
    x2 = scaled_linear(h1, w2_t, dinv, tm=tm)
    out = gcn_propagate(adj_t, dinv, x2, bias=params["b2"], tm=tm, tk=tk,
                        out_dtype=jnp.float32)
    return out[:n]


# ----------------------------------- main ------------------------------------
if __name__ == "__main__":
    n, d = 256, 128                    # nodes, n_features
    n_hidden, n_classes = 64, 16
    nnz_attr, nnz_edge = 1024, 2048

    key = jax.random.PRNGKey(0)
    ks = jax.random.split(key, 7)

    # sparse COO indices for attributes and edges
    attr_idx = jnp.stack([
        jax.random.randint(ks[0], (nnz_attr,), 0, n),
        jax.random.randint(ks[1], (nnz_attr,), 0, d),
    ]).astype(jnp.int32)
    edge_idx = jnp.stack([
        jax.random.randint(ks[2], (nnz_edge,), 0, n),
        jax.random.randint(ks[3], (nnz_edge,), 0, n),
    ]).astype(jnp.int32)

    # deterministic parameters (shapes from the module's __init__)
    params = {
        # conv1 = SparseGCNConv(n_features, n_hidden): lin.weight (bias unused)
        "W1": 0.1 * jax.random.normal(ks[4], (n_hidden, d), jnp.float32),
        # conv2 = GCNConv(n_hidden, n_classes): lin.weight + bias
        "W2": 0.1 * jax.random.normal(ks[5], (n_classes, n_hidden), jnp.float32),
        "b2": 0.01 * jax.random.normal(ks[6], (n_classes,), jnp.float32),
    }

    out = gcn_forward(attr_idx, edge_idx, n, d, params)
    out = jax.block_until_ready(out)
    assert out.shape == (n, n_classes), out.shape
    assert bool(jnp.all(jnp.isfinite(out)))
    print("KERNEL_OK")
</pallas_src>

<mosaic_0001>
module attributes {stable_mosaic.version = 11 : i64} {
  func.func @_linear_kernel(%arg0: i32, %arg1: memref<128x128xbf16, #tpu.memory_space<vmem>>, %arg2: memref<128x64xbf16, #tpu.memory_space<vmem>>, %arg3: memref<128x1xf32, #tpu.memory_space<vmem>>, %arg4: memref<128x64xbf16, #tpu.memory_space<vmem>>) attributes {dimension_semantics = [#tpu.dimension_semantics<parallel>], iteration_bounds = array<i64: 2>, scalar_prefetch = 0 : i64, scratch_operands = 0 : i64, tpu.core_type = #tpu.core_type<tc>, window_params = [{transform_indices = @transform_0, window_bounds = array<i64: 128, 128>}, {pipeline_mode = #tpu.pipeline_mode<synchronous>, transform_indices = @transform_1, window_bounds = array<i64: 128, 64>}, {transform_indices = @transform_2, window_bounds = array<i64: 128, 1>}, {transform_indices = @transform_3, window_bounds = array<i64: 128, 64>}]} {
    %c0 = arith.constant 0 : index
    %c0_0 = arith.constant 0 : index
    %0 = vector.load %arg1[%c0, %c0_0] : memref<128x128xbf16, #tpu.memory_space<vmem>>, vector<128x128xbf16>
    %c0_1 = arith.constant 0 : index
    %c0_2 = arith.constant 0 : index
    %1 = vector.load %arg2[%c0_1, %c0_2] : memref<128x64xbf16, #tpu.memory_space<vmem>>, vector<128x64xbf16>
    %cst = arith.constant dense<0.000000e+00> : vector<128x64xf32>
    %2 = tpu.matmul %0, %1, %cst {dimension_numbers = #tpu.dot_dimension_numbers<[1], [0], [0], [1], [0, 0, 1, 1], [], []>} : vector<128x128xbf16>, vector<128x64xbf16>, vector<128x64xf32> -> vector<128x64xf32>
    %c0_3 = arith.constant 0 : index
    %c0_4 = arith.constant 0 : index
    %3 = vector.load %arg3[%c0_3, %c0_4] : memref<128x1xf32, #tpu.memory_space<vmem>>, vector<128x1xf32>
    %4 = vector.broadcast %3 : vector<128x1xf32> to vector<128x64xf32>
    %5 = arith.mulf %2, %4 : vector<128x64xf32>
    %6 = arith.truncf %5 : vector<128x64xf32> to vector<128x64xbf16>
    %c0_5 = arith.constant 0 : index
    %c0_6 = arith.constant 0 : index
    %7 = vector.load %arg4[%c0_5, %c0_6] : memref<128x64xbf16, #tpu.memory_space<vmem>>, vector<128x64xbf16>
    tpu.vector_store %arg4[%c0_5, %c0_6], %6 {strides = array<i32>} : memref<128x64xbf16, #tpu.memory_space<vmem>>, vector<128x64xbf16>,
    return
  }
  func.func @transform_0(%arg0: i32) -> (i32, i32) {
    %c0_i32 = arith.constant 0 : i32
    %c0_i32_0 = arith.constant 0 : i32
    return %arg0, %c0_i32 : i32, i32
  }
  func.func @transform_1(%arg0: i32) -> (i32, i32) {
    %c0_i32 = arith.constant 0 : i32
    %c0_i32_0 = arith.constant 0 : i32
    %c0_i32_1 = arith.constant 0 : i32
    return %c0_i32, %c0_i32_0 : i32, i32
  }
  func.func @transform_2(%arg0: i32) -> (i32, i32) {
    %c0_i32 = arith.constant 0 : i32
    %c0_i32_0 = arith.constant 0 : i32
    return %arg0, %c0_i32 : i32, i32
  }
  func.func @transform_3(%arg0: i32) -> (i32, i32) {
    %c0_i32 = arith.constant 0 : i32
    %c0_i32_0 = arith.constant 0 : i32
    return %arg0, %c0_i32 : i32, i32
  }
}

</mosaic_0001>

<llo_original>
// kernel: tpu_custom_call.1
$region0: #{tpu_custom_call.1}
  #allocation0 [shape = 'u32[]', space=smem, size = 0x4, offset = 0x4, fixed_abs, tag = 'smem constant byte address 0x4 - core index']
  #allocation1 [shape = 'u32[72,128]{1,0:T(1,128)}', space=vmem, size = 0x9000, scoped, tag = 'internal scratch']
  %s0 = inlined_call_operand.vmem [shape: bf16[256,128], index: 0, kind: input, shape index: {}]
  %s1 = inlined_call_operand.vmem [shape: bf16[128,64], index: 1, kind: input, shape index: {}]
  %s2 = inlined_call_operand.vmem [shape: f32[256,1], index: 2, kind: input, shape index: {}]
  %s3 = inlined_call_operand.vmem [shape: bf16[256,64], index: 3, kind: output, shape index: {}]
  %s4 = sld [smem:[#allocation0]]
  $region45: #{tpu_custom_call.1} parent=0
    _
  %s6 = ssub.s32 1, %s4
  %s7 = scalar_select 0, %s6, %s4
  loop: start=0, step=1, limit=4
  $region2: #{tpu_custom_call.1} parent=0 // loop_pre_header
    _
  $region3: #{tpu_custom_call.1} parent=0 // loop_header
    %s9 = sphi 0, %s13
    %p10 = scmp.ge.s32.totalorder %s9, 4
    %s19 = sphi 0, %s21
    %s22 = sphi 0, %s19
    %s23 = sphi 0, %s22
    %s39 = sphi 0, %s23
    %s43 = sphi 0, %s43
    %s45 = sphi 0, %s43
    %s46 = sphi 0, %s45
    %s60 = sphi 0, %s46
    %s66 = sphi 0, %s68
    %s69 = sphi 0, %s66
    %s70 = sphi 0, %s69
    %s86 = sphi 0, %s70
    %s92 = sphi 0, %s94
    %s95 = sphi 0, %s92
    %s96 = sphi 0, %s95
    %s112 = sphi 0, %s96
  $region4: #{tpu_custom_call.1} parent=0 // loop_header_branch
    %12 = sbr.rel (%p10) target = $region8
  $region5: #{tpu_custom_call.1} parent=0 // loop_body
    %s14 = ssub.s32 %s9, 1
    %s15 = ssub.s32 %s9, 2
    %s16 = sadd.s32 %s9, 1
    %s17 = ssub.s32 %s9, %s16
    %p18 = scmp.eq.s32.totalorder %s17, 0
    %s20 = sadd.s32 %s19, 1
    %s21 = scalar_select %p18, %s19, %s20
    %p24 = pneg %p18
    %p25 = scmp.eq.s32.totalorder %s9, 1
    %p26 = por %p24, %p25
    %p27 = scmp.ne.s32.totalorder %s19, %s22
    %p28 = scmp.eq.s32.totalorder %s9, 0
    %p29 = por %p27, %p28
    %p30 = scmp.ne.s32.totalorder %s19, %s22
    %p31 = scmp.eq.s32.totalorder %s14, 1
    %p32 = por %p30, %p31
    %p33 = scmp.ne.s32.totalorder %s22, %s23
    %p34 = scmp.eq.s32.totalorder %s14, 0
    %p35 = por %p33, %p34
    %p36 = scmp.ne.s32.totalorder %s22, %s23
    %p37 = scmp.eq.s32.totalorder %s15, 1
    %p38 = por %p36, %p37
    %p40 = scmp.ne.s32.totalorder %s23, %s39
    %p41 = scmp.eq.s32.totalorder %s15, 0
    %p42 = por %p40, %p41
    %s44 = sadd.s32 %s43, 1
    %p47 = scmp.eq.s32.totalorder %s9, 1
    %p48 = scmp.ne.s32.totalorder %s43, %s45
    %p49 = scmp.eq.s32.totalorder %s9, 0
    %p50 = por %p48, %p49
    %p51 = scmp.ne.s32.totalorder %s43, %s45
    %p52 = scmp.eq.s32.totalorder %s14, 1
    %p53 = por %p51, %p52
    %p54 = scmp.ne.s32.totalorder %s45, %s46
    %p55 = scmp.eq.s32.totalorder %s14, 0
    %p56 = por %p54, %p55
    %p57 = scmp.ne.s32.totalorder %s45, %s46
    %p58 = scmp.eq.s32.totalorder %s15, 1
    %p59 = por %p57, %p58
    %p61 = scmp.ne.s32.totalorder %s46, %s60
    %p62 = scmp.eq.s32.totalorder %s15, 0
    %p63 = por %p61, %p62
    %s64 = ssub.s32 %s9, %s16
    %p65 = scmp.eq.s32.totalorder %s64, 0
    %s67 = sadd.s32 %s66, 1
    %s68 = scalar_select %p65, %s66, %s67
    %p71 = pneg %p65
    %p72 = scmp.eq.s32.totalorder %s9, 1
    %p73 = por %p71, %p72
    %p74 = scmp.ne.s32.totalorder %s66, %s69
    %p75 = scmp.eq.s32.totalorder %s9, 0
    %p76 = por %p74, %p75
    %p77 = scmp.ne.s32.totalorder %s66, %s69
    %p78 = scmp.eq.s32.totalorder %s14, 1
    %p79 = por %p77, %p78
    %p80 = scmp.ne.s32.totalorder %s69, %s70
    %p81 = scmp.eq.s32.totalorder %s14, 0
    %p82 = por %p80, %p81
    %p83 = scmp.ne.s32.totalorder %s69, %s70
    %p84 = scmp.eq.s32.totalorder %s15, 1
    %p85 = por %p83, %p84
    %p87 = scmp.ne.s32.totalorder %s70, %s86
    %p88 = scmp.eq.s32.totalorder %s15, 0
    %p89 = por %p87, %p88
    %s90 = ssub.s32 %s9, %s16
    %p91 = scmp.eq.s32.totalorder %s90, 0
    %s93 = sadd.s32 %s92, 1
    %s94 = scalar_select %p91, %s92, %s93
    %p97 = pneg %p91
    %p98 = scmp.eq.s32.totalorder %s9, 1
    %p99 = por %p97, %p98
    %p100 = scmp.ne.s32.totalorder %s92, %s95
    %p101 = scmp.eq.s32.totalorder %s9, 0
    %p102 = por %p100, %p101
    %p103 = scmp.ne.s32.totalorder %s92, %s95
    %p104 = scmp.eq.s32.totalorder %s14, 1
    %p105 = por %p103, %p104
    %p106 = scmp.ne.s32.totalorder %s95, %s96
    %p107 = scmp.eq.s32.totalorder %s14, 0
    %p108 = por %p106, %p107
    %p109 = scmp.ne.s32.totalorder %s95, %s96
    %p110 = scmp.eq.s32.totalorder %s15, 1
    %p111 = por %p109, %p110
    %p113 = scmp.ne.s32.totalorder %s96, %s112
    %p114 = scmp.eq.s32.totalorder %s15, 0
    %p115 = por %p113, %p114
    %p116 = scmp.le.s32.totalorder 1, %s9
    %p117 = scmp.lt.s32.totalorder %s9, 3
    %p118 = pnand %p116, %p117
    %p119 = pneg %p118
    // Predicated region
    $region9: #{tpu_custom_call.1} parent=5 // pred_check
      _
    $region10: #{tpu_custom_call.1} parent=5 // pred_check_branch
      %121 = sbr.rel (%p118) target = $region12
    $region11: #{tpu_custom_call.1} parent=5 // pred_region
      %s122 = ssub.s32 %s9, 1
      // Predicated region
      $region13: #{tpu_custom_call.1} parent=11 // pred_check
        %p123 = pneg %p56
      $region14: #{tpu_custom_call.1} parent=11 // pred_check_branch
        %125 = sbr.rel (%p123) target = $region16
      $region15: #{tpu_custom_call.1} parent=11 // pred_region
        _
      $region16: #{tpu_custom_call.1} parent=11 // pred_fallthru
        _
    $region12: #{tpu_custom_call.1} parent=5 // pred_fallthru
      _
    %p126 = scmp.lt.s32.totalorder %s9, 2
    // Predicated region
    $region17: #{tpu_custom_call.1} parent=5 // pred_check
      %p127 = pneg %p126
    $region18: #{tpu_custom_call.1} parent=5 // pred_check_branch
      %129 = sbr.rel (%p127) target = $region20
    $region19: #{tpu_custom_call.1} parent=5 // pred_region
      // Predicated region
      $region21: #{tpu_custom_call.1} parent=19 // pred_check
        %p130 = pneg %p29
      $region22: #{tpu_custom_call.1} parent=19 // pred_check_branch
        %132 = sbr.rel (%p130) target = $region24
      $region23: #{tpu_custom_call.1} parent=19 // pred_region
        %s133 = smul.u32 16, %s9
        %p134 = scmp.lt.s32.totalorder %s133, 31
        %s135 = scalar_select %p134, %s133, 31
        %s136 = smul.addr %s135, 4
        %s137 = scalar_lea.vmem %s0, %s136
        %s138 = smul.u32 16, %s9
      $region24: #{tpu_custom_call.1} parent=19 // pred_fallthru
        _
      // Predicated region
      $region25: #{tpu_custom_call.1} parent=19 // pred_check
        %p139 = pneg %p76
      $region26: #{tpu_custom_call.1} parent=19 // pred_check_branch
        %141 = sbr.rel (%p139) target = $region28
      $region27: #{tpu_custom_call.1} parent=19 // pred_region
        %s142 = smul.u32 16, %s9
        %p143 = scmp.lt.s32.totalorder %s142, 31
        %s144 = scalar_select %p143, %s142, 31
        %s145 = smul.addr %s144, 8
        %s146 = scalar_lea.vmem %s2, %s145
        %s147 = smul.u32 16, %s9
      $region28: #{tpu_custom_call.1} parent=19 // pred_fallthru
        _
    $region20: #{tpu_custom_call.1} parent=5 // pred_fallthru
      _
    %p148 = scmp.le.s32.totalorder 1, %s9
    %p149 = scmp.lt.s32.totalorder %s9, 3
    %p150 = pnand %p148, %p149
    %p151 = pneg %p150
    // Predicated region
    $region29: #{tpu_custom_call.1} parent=5 // pred_check
      _
    $region30: #{tpu_custom_call.1} parent=5 // pred_check_branch
      %153 = sbr.rel (%p150) target = $region32
    $region31: #{tpu_custom_call.1} parent=5 // pred_region
      %s154 = ssub.s32 %s9, 1
      %s155 = smul.u32 16, %s14
      %p156 = scmp.lt.s32.totalorder %s155, 31
      %s157 = scalar_select %p156, %s155, 31
      %s158 = smul.addr %s157, 4
      %s159 = scalar_lea.vmem %s0, %s158
      %p160 = pneg %p35
      %p161 = pneg %p32
      %p162 = pneg %p56
      %p163 = pneg %p53
      %s164 = smul.u32 16, %s14
      %p165 = scmp.lt.s32.totalorder %s164, 31
      %s166 = scalar_select %p165, %s164, 31
      %s167 = smul.addr %s166, 8
      %s168 = scalar_lea.vmem %s2, %s167
      %p169 = pneg %p82
      %p170 = pneg %p79
      %p171 = pneg %p108
      %p172 = pneg %p105
      %s173 = smul.u32 16, %s14
      %p174 = scmp.lt.s32.totalorder %s173, 31
      %s175 = scalar_select %p174, %s173, 31
      %s176 = smul.addr %s175, 4
      %s177 = scalar_lea.vmem %s3, %s176
      %s178 = smul.u32 16, %s14
      %p179 = scmp.lt.s32.totalorder %s178, 31
      %s180 = scalar_select %p179, %s178, 31
      %s181 = smul.addr %s180, 4
      %s182 = scalar_lea.vmem %s0, %s181
      %s183 = smul.u32 16, %s14
      %s184 = smul.u32 16, %s14
      %p185 = scmp.lt.s32.totalorder %s184, 31
      %s186 = scalar_select %p185, %s184, 31
      %s187 = smul.addr %s186, 8
      %s188 = scalar_lea.vmem %s2, %s187
      %s189 = smul.u32 16, %s14
      %s190 = smul.u32 16, %s14
      %p191 = scmp.lt.s32.totalorder %s190, 31
      %s192 = scalar_select %p191, %s190, 31
      %s193 = smul.addr %s192, 4
      %s194 = scalar_lea.vmem %s3, %s193
      %s195 = smul.u32 16, %s14
      %v196 = vld [vmem:[%s182] sm:$0xf]
      %v197 = vld [vmem:[%s182 + $0x4] sm:$0xf]
      %v198 = vld [vmem:[%s182 + $0x8] sm:$0xf]
      %v199 = vld [vmem:[%s182 + $0xc] sm:$0xf]
      %v200 = vld [vmem:[%s182 + $0x10] sm:$0xf]
      %v201 = vld [vmem:[%s182 + $0x14] sm:$0xf]
      %v202 = vld [vmem:[%s182 + $0x18] sm:$0xf]
      %v203 = vld [vmem:[%s182 + $0x1c] sm:$0xf]
      %v204 = vld [vmem:[%s182 + $0x20] sm:$0xf]
      %v205 = vld [vmem:[%s182 + $0x24] sm:$0xf]
      %v206 = vld [vmem:[%s182 + $0x28] sm:$0xf]
      %v207 = vld [vmem:[%s182 + $0x2c] sm:$0xf]
      %v208 = vld [vmem:[%s182 + $0x30] sm:$0xf]
      %v209 = vld [vmem:[%s182 + $0x34] sm:$0xf]
      %v210 = vld [vmem:[%s182 + $0x38] sm:$0xf]
      %v211 = vld [vmem:[%s182 + $0x3c] sm:$0xf]
      %v212 = vld [vmem:[%s1] sm:$0xf]
      %v213 = vld [vmem:[%s1 + $0x4] sm:$0xf]
      %v214 = vld [vmem:[%s1 + $0x8] sm:$0xf]
      %v215 = vld [vmem:[%s1 + $0xc] sm:$0xf]
      %v216 = vld [vmem:[%s1 + $0x10] sm:$0xf]
      %v217 = vld [vmem:[%s1 + $0x14] sm:$0xf]
      %v218 = vld [vmem:[%s1 + $0x18] sm:$0xf]
      %v219 = vld [vmem:[%s1 + $0x1c] sm:$0xf]
      %v220 = vld [vmem:[%s1 + $0x20] sm:$0xf]
      %v221 = vld [vmem:[%s1 + $0x24] sm:$0xf]
      %v222 = vld [vmem:[%s1 + $0x28] sm:$0xf]
      %v223 = vld [vmem:[%s1 + $0x2c] sm:$0xf]
      %v224 = vld [vmem:[%s1 + $0x30] sm:$0xf]
      %v225 = vld [vmem:[%s1 + $0x34] sm:$0xf]
      %v226 = vld [vmem:[%s1 + $0x38] sm:$0xf]
      %v227 = vld [vmem:[%s1 + $0x3c] sm:$0xf]
      %v244 = vunpack.c.l.b16 %v196
      %v245 = vunpack.c.l.b16 %v197
      %v246 = vunpack.c.l.b16 %v198
      %v247 = vunpack.c.l.b16 %v199
      %v248 = vunpack.c.l.b16 %v200
      %v249 = vunpack.c.l.b16 %v201
      %v250 = vunpack.c.l.b16 %v202
      %v251 = vunpack.c.l.b16 %v203
      %v252 = vunpack.c.l.b16 %v204
      %v253 = vunpack.c.l.b16 %v205
      %v254 = vunpack.c.l.b16 %v206
      %v255 = vunpack.c.l.b16 %v207
      %v256 = vunpack.c.l.b16 %v208
      %v257 = vunpack.c.l.b16 %v209
      %v258 = vunpack.c.l.b16 %v210
      %v259 = vunpack.c.l.b16 %v211
      %v260 = vpack.c.b16 %v245, %v244
      %v261 = vpack.c.b16 %v247, %v246
      %v262 = vpack.c.b16 %v249, %v248
      %v263 = vpack.c.b16 %v251, %v250
      %v264 = vpack.c.b16 %v253, %v252
      %v265 = vpack.c.b16 %v255, %v254
      %v266 = vpack.c.b16 %v257, %v256
      %v267 = vpack.c.b16 %v259, %v258
      %v292 = vunpack.c.l.b16 %v212
      %v293 = vunpack.c.l.b16 %v213
      %v294 = vunpack.c.l.b16 %v214
      %v295 = vunpack.c.l.b16 %v215
      %v296 = vunpack.c.l.b16 %v216
      %v297 = vunpack.c.l.b16 %v217
      %v298 = vunpack.c.l.b16 %v218
      %v299 = vunpack.c.l.b16 %v219
      %v300 = vunpack.c.l.b16 %v220
      %v301 = vunpack.c.l.b16 %v221
      %v302 = vunpack.c.l.b16 %v222
      %v303 = vunpack.c.l.b16 %v223
      %v304 = vunpack.c.l.b16 %v224
      %v305 = vunpack.c.l.b16 %v225
      %v306 = vunpack.c.l.b16 %v226
      %v307 = vunpack.c.l.b16 %v227
      %v308 = vpack.c.b16 %v293, %v292
      %v309 = vpack.c.b16 %v295, %v294
      %v310 = vpack.c.b16 %v297, %v296
      %v311 = vpack.c.b16 %v299, %v298
      %v312 = vpack.c.b16 %v301, %v300
      %v313 = vpack.c.b16 %v303, %v302
      %v314 = vpack.c.b16 %v305, %v304
      %v315 = vpack.c.b16 %v307, %v306
      %324 = vmatpush.bf16.msra.mxu0 %v315
      %325 = vmatpush.bf16.msra.mxu0 %v314
      %326 = vmatpush.bf16.msra.mxu0 %v313
      %327 = vmatpush.bf16.msra.mxu0 %v312
      %328 = vmatpush.bf16.msra.mxu0 %v311
      %329 = vmatpush.bf16.msra.mxu0 %v310
      %330 = vmatpush.bf16.msra.mxu0 %v309
      %331 = vmatpush.bf16.msra.mxu0 %v308
      %332 = vmatmul.bf16.gmra.mxu0 %v260
      %v333 = vpop.f32.mrf.mxu0
      %v334 = vadd.f32 0.0, %v333
      %v335 = vpop.f32.mrf.mxu0
      %v336 = vadd.f32 0.0, %v335
      %337 = vmatmul.bf16.gmra.mxu0 %v261
      %v338 = vpop.f32.mrf.mxu0
      %v339 = vadd.f32 0.0, %v338
      %v340 = vpop.f32.mrf.mxu0
      %v341 = vadd.f32 0.0, %v340
      %342 = vmatmul.bf16.gmra.mxu0 %v262
      %v343 = vpop.f32.mrf.mxu0
      %v344 = vadd.f32 0.0, %v343
      %v345 = vpop.f32.mrf.mxu0
      %v346 = vadd.f32 0.0, %v345
      %347 = vmatmul.bf16.gmra.mxu0 %v263
      %v348 = vpop.f32.mrf.mxu0
      %v349 = vadd.f32 0.0, %v348
      %v350 = vpop.f32.mrf.mxu0
      %v351 = vadd.f32 0.0, %v350
      %352 = vmatmul.bf16.gmra.mxu0 %v264
      %v353 = vpop.f32.mrf.mxu0
      %v354 = vadd.f32 0.0, %v353
      %v355 = vpop.f32.mrf.mxu0
      %v356 = vadd.f32 0.0, %v355
      %357 = vmatmul.bf16.gmra.mxu0 %v265
      %v358 = vpop.f32.mrf.mxu0
      %v359 = vadd.f32 0.0, %v358
      %v360 = vpop.f32.mrf.mxu0
      %v361 = vadd.f32 0.0, %v360
      %362 = vmatmul.bf16.gmra.mxu0 %v266
      %v363 = vpop.f32.mrf.mxu0
      %v364 = vadd.f32 0.0, %v363
      %v365 = vpop.f32.mrf.mxu0
      %v366 = vadd.f32 0.0, %v365
      %367 = vmatmul.bf16.gmra.mxu0 %v267
      %v368 = vpop.f32.mrf.mxu0
      %v369 = vadd.f32 0.0, %v368
      %v370 = vpop.f32.mrf.mxu0
      %v371 = vadd.f32 0.0, %v370
      %372 = vdwg.mxu0
      %v373 = vld [vmem:[%s188] sm:$0xff]
      %v374 = vld [vmem:[%s188 + $0x8] sm:$0xff]
      %v375 = vld [vmem:[%s188 + $0x10] sm:$0xff]
      %v376 = vld [vmem:[%s188 + $0x18] sm:$0xff]
      %v377 = vld [vmem:[%s188 + $0x20] sm:$0xff]
      %v378 = vld [vmem:[%s188 + $0x28] sm:$0xff]
      %v379 = vld [vmem:[%s188 + $0x30] sm:$0xff]
      %v380 = vld [vmem:[%s188 + $0x38] sm:$0xff]
      %v381 = vld [vmem:[%s188 + $0x40] sm:$0xff]
      %v382 = vld [vmem:[%s188 + $0x48] sm:$0xff]
      %v383 = vld [vmem:[%s188 + $0x50] sm:$0xff]
      %v384 = vld [vmem:[%s188 + $0x58] sm:$0xff]
      %v385 = vld [vmem:[%s188 + $0x60] sm:$0xff]
      %v386 = vld [vmem:[%s188 + $0x68] sm:$0xff]
      %v387 = vld [vmem:[%s188 + $0x70] sm:$0xff]
      %v388 = vld [vmem:[%s188 + $0x78] sm:$0xff]
      %390 = vset.pattern.permute.xlu0 0
      %391 = vperm.xlu0 %390, %v373
      %v392 = vpop.permute.xlu0 %391
      %395 = vset.pattern.permute.xlu0 0
      %396 = vperm.xlu0 %395, %v374
      %v397 = vpop.permute.xlu0 %396
      %400 = vset.pattern.permute.xlu0 0
      %401 = vperm.xlu0 %400, %v375
      %v402 = vpop.permute.xlu0 %401
      %405 = vset.pattern.permute.xlu0 0
      %406 = vperm.xlu0 %405, %v376
      %v407 = vpop.permute.xlu0 %406
      %410 = vset.pattern.permute.xlu0 0
      %411 = vperm.xlu0 %410, %v377
      %v412 = vpop.permute.xlu0 %411
      %415 = vset.pattern.permute.xlu0 0
      %416 = vperm.xlu0 %415, %v378
      %v417 = vpop.permute.xlu0 %416
      %420 = vset.pattern.permute.xlu0 0
      %421 = vperm.xlu0 %420, %v379
      %v422 = vpop.permute.xlu0 %421
      %425 = vset.pattern.permute.xlu0 0
      %426 = vperm.xlu0 %425, %v380
      %v427 = vpop.permute.xlu0 %426
      %430 = vset.pattern.permute.xlu0 0
      %431 = vperm.xlu0 %430, %v381
      %v432 = vpop.permute.xlu0 %431
      %435 = vset.pattern.permute.xlu0 0
      %436 = vperm.xlu0 %435, %v382
      %v437 = vpop.permute.xlu0 %436
      %440 = vset.pattern.permute.xlu0 0
      %441 = vperm.xlu0 %440, %v383
      %v442 = vpop.permute.xlu0 %441
      %445 = vset.pattern.permute.xlu0 0
      %446 = vperm.xlu0 %445, %v384
      %v447 = vpop.permute.xlu0 %446
      %450 = vset.pattern.permute.xlu0 0
      %451 = vperm.xlu0 %450, %v385
      %v452 = vpop.permute.xlu0 %451
      %455 = vset.pattern.permute.xlu0 0
      %456 = vperm.xlu0 %455, %v386
      %v457 = vpop.permute.xlu0 %456
      %460 = vset.pattern.permute.xlu0 0
      %461 = vperm.xlu0 %460, %v387
      %v462 = vpop.permute.xlu0 %461
      %465 = vset.pattern.permute.xlu0 0
      %466 = vperm.xlu0 %465, %v388
      %v467 = vpop.permute.xlu0 %466
      %v469 = vmul.f32 %v334, %v392
      %v470 = vmul.f32 %v336, %v397
      %v471 = vmul.f32 %v339, %v402
      %v472 = vmul.f32 %v341, %v407
      %v473 = vmul.f32 %v344, %v412
      %v474 = vmul.f32 %v346, %v417
      %v475 = vmul.f32 %v349, %v422
      %v476 = vmul.f32 %v351, %v427
      %v477 = vmul.f32 %v354, %v432
      %v478 = vmul.f32 %v356, %v437
      %v479 = vmul.f32 %v359, %v442
      %v480 = vmul.f32 %v361, %v447
      %v481 = vmul.f32 %v364, %v452
      %v482 = vmul.f32 %v366, %v457
      %v483 = vmul.f32 %v369, %v462
      %v484 = vmul.f32 %v371, %v467
      %v485 = vpack.c.bf16 %v469, %v469
      %v486 = vpack.c.bf16 %v470, %v470
      %v487 = vpack.c.bf16 %v471, %v471
      %v488 = vpack.c.bf16 %v472, %v472
      %v489 = vpack.c.bf16 %v473, %v473
      %v490 = vpack.c.bf16 %v474, %v474
      %v491 = vpack.c.bf16 %v475, %v475
      %v492 = vpack.c.bf16 %v476, %v476
      %v493 = vpack.c.bf16 %v477, %v477
      %v494 = vpack.c.bf16 %v478, %v478
      %v495 = vpack.c.bf16 %v479, %v479
      %v496 = vpack.c.bf16 %v480, %v480
      %v497 = vpack.c.bf16 %v481, %v481
      %v498 = vpack.c.bf16 %v482, %v482
      %v499 = vpack.c.bf16 %v483, %v483
      %v500 = vpack.c.bf16 %v484, %v484
      %vm501 = vcmask 519168
      %502 = vst.msk [vmem:[%s194] sm:$0xf] %vm501, %v485
      %503 = vst.msk [vmem:[%s194 + $0x4] sm:$0xf] %vm501, %v486
      %504 = vst.msk [vmem:[%s194 + $0x8] sm:$0xf] %vm501, %v487
      %505 = vst.msk [vmem:[%s194 + $0xc] sm:$0xf] %vm501, %v488
      %506 = vst.msk [vmem:[%s194 + $0x10] sm:$0xf] %vm501, %v489
      %507 = vst.msk [vmem:[%s194 + $0x14] sm:$0xf] %vm501, %v490
      %508 = vst.msk [vmem:[%s194 + $0x18] sm:$0xf] %vm501, %v491
      %509 = vst.msk [vmem:[%s194 + $0x1c] sm:$0xf] %vm501, %v492
      %510 = vst.msk [vmem:[%s194 + $0x20] sm:$0xf] %vm501, %v493
      %511 = vst.msk [vmem:[%s194 + $0x24] sm:$0xf] %vm501, %v494
      %512 = vst.msk [vmem:[%s194 + $0x28] sm:$0xf] %vm501, %v495
      %513 = vst.msk [vmem:[%s194 + $0x2c] sm:$0xf] %vm501, %v496
      %514 = vst.msk [vmem:[%s194 + $0x30] sm:$0xf] %vm501, %v497
      %515 = vst.msk [vmem:[%s194 + $0x34] sm:$0xf] %vm501, %v498
      %516 = vst.msk [vmem:[%s194 + $0x38] sm:$0xf] %vm501, %v499
      %517 = vst.msk [vmem:[%s194 + $0x3c] sm:$0xf] %vm501, %v500
      %s518 = smul.u32 16, %s14
      %p519 = scmp.lt.s32.totalorder %s518, 31
      %s520 = scalar_select %p519, %s518, 31
      %s521 = smul.addr %s520, 4
      %s522 = scalar_lea.vmem %s3, %s521
      // Predicated region
      $region33: #{tpu_custom_call.1} parent=31 // pred_check
        %p523 = pneg %p105
      $region34: #{tpu_custom_call.1} parent=31 // pred_check_branch
        %525 = sbr.rel (%p523) target = $region36
      $region35: #{tpu_custom_call.1} parent=31 // pred_region
        %s526 = smul.u32 16, %s14
      $region36: #{tpu_custom_call.1} parent=31 // pred_fallthru
        _
    $region32: #{tpu_custom_call.1} parent=5 // pred_fallthru
      _
    %p527 = scmp.le.s32.totalorder 2, %s9
    // Predicated region
    $region37: #{tpu_custom_call.1} parent=5 // pred_check
      %p528 = pneg %p527
    $region38: #{tpu_custom_call.1} parent=5 // pred_check_branch
      %530 = sbr.rel (%p528) target = $region40
    $region39: #{tpu_custom_call.1} parent=5 // pred_region
      %s531 = ssub.s32 %s9, 2
      // Predicated region
      $region41: #{tpu_custom_call.1} parent=39 // pred_check
        %p532 = pneg %p111
      $region42: #{tpu_custom_call.1} parent=39 // pred_check_branch
        %534 = sbr.rel (%p532) target = $region44
      $region43: #{tpu_custom_call.1} parent=39 // pred_region
        %s535 = smul.u32 16, %s15
        %p536 = scmp.lt.s32.totalorder %s535, 31
        %s537 = scalar_select %p536, %s535, 31
        %s538 = smul.addr %s537, 4
        %s539 = scalar_lea.vmem %s3, %s538
      $region44: #{tpu_custom_call.1} parent=39 // pred_fallthru
        _
    $region40: #{tpu_custom_call.1} parent=5 // pred_fallthru
      _
  $region6: #{tpu_custom_call.1} parent=0 // loop_footer
    %s13 = sadd.s32 1, %s9
  $region7: #{tpu_custom_call.1} parent=0 // loop_footer_branch
    %8 = sbr.rel target = $region3
  $region8: #{tpu_custom_call.1} parent=0 // loop_exit
    _

</llo_original>
